<compile_context>
chip_gen: v5e
topology: v5e:2x2
jax: 0.10.0
libtpu: 0.0.40
codegen_flags: <defaults>
</compile_context>

<pallas_src>
import jax
import jax.numpy as jnp
from jax.experimental import pallas as pl
from jax.experimental.pallas import tpu as pltpu


def _round_up(x, m):
    return ((x + m - 1) // m) * m


def autoencoder_kernel(x_ref, we_ref, be_ref, wd_ref, bd_ref, o_ref):
    """Fused encoder->decoder forward: sigmoid(relu(x @ We + be) @ Wd + bd)."""
    x = x_ref[...]

    # Encoder: Linear + ReLU.  MXU matmul with f32 accumulation; bias add and
    # ReLU stay in f32 on the VPU (v5e has no bf16 VPU path).
    h = jnp.dot(x, we_ref[...], preferred_element_type=jnp.float32)
    h = jnp.maximum(h + be_ref[...], 0.0)

    # Decoder: Linear + Sigmoid.  Cast back to the matmul operand dtype for
    # the MXU; accumulate in f32; sigmoid (EUP exp) in f32.
    y = jnp.dot(h.astype(wd_ref.dtype), wd_ref[...],
                preferred_element_type=jnp.float32)
    y = y + bd_ref[...]
    o_ref[...] = jax.nn.sigmoid(y).astype(o_ref.dtype)


def autoencoder_forward(x, w_enc, b_enc, w_dec, b_dec, *,
                        compute_dtype=jnp.float32, block_b=128):
    """x: [B, d], w_enc: [d, L], b_enc: [1, L], w_dec: [L, d], b_dec: [1, d]."""
    B, d = x.shape
    L = w_enc.shape[1]

    LANE = 128
    d_p = _round_up(d, LANE)            # lane-dense output / MXU N dim
    L_p = _round_up(L, LANE)
    tb = min(block_b, _round_up(B, 8))  # batch tile, multiple of 8 (f32 sublane)
    B_p = _round_up(B, tb)
    grid_b = B_p // tb

    f32 = jnp.float32
    # Zero-padding is semantics-preserving: padded input features multiply
    # zero weight rows; padded latent units are relu(0)=0 and hit zero decoder
    # rows; padded output columns / batch rows are sliced off below.
    x_p = jnp.zeros((B_p, d_p), compute_dtype).at[:B, :d].set(
        x.astype(compute_dtype))
    we_p = jnp.zeros((d_p, L_p), compute_dtype).at[:d, :L].set(
        w_enc.astype(compute_dtype))
    wd_p = jnp.zeros((L_p, d_p), compute_dtype).at[:L, :d].set(
        w_dec.astype(compute_dtype))
    be_p = jnp.zeros((1, L_p), f32).at[:, :L].set(b_enc.astype(f32).reshape(1, L))
    bd_p = jnp.zeros((1, d_p), f32).at[:, :d].set(b_dec.astype(f32).reshape(1, d))

    # Weights/biases: whole-array, VMEM-resident, single-buffered (their block
    # index never changes across the batch grid -> no double-buffer waste).
    def resident():
        return pl.BlockSpec(memory_space=pltpu.MemorySpace.VMEM)

    itemsize = jnp.dtype(compute_dtype).itemsize
    weight_bytes = (d_p * L_p + L_p * d_p) * itemsize + (L_p + d_p) * 4
    tile_bytes = tb * d_p * (itemsize + 4)          # one x tile + one out tile
    vmem_bytes = weight_bytes + 2 * tile_bytes      # double-buffered x / out
    vmem_limit = int(min(max(2 * vmem_bytes, 32 * 1024 * 1024),
                         100 * 1024 * 1024))

    cost = pl.CostEstimate(
        flops=4 * B_p * d_p * L_p,                  # two matmuls: 2*M*K*N each
        transcendentals=B_p * d_p,                  # sigmoid exp
        bytes_accessed=int(B_p * d_p * itemsize     # x in
                           + weight_bytes           # weights + biases
                           + B_p * d_p * 4),        # f32 out
    )

    out = pl.pallas_call(
        autoencoder_kernel,
        out_shape=jax.ShapeDtypeStruct((B_p, d_p), jnp.float32),
        grid_spec=pltpu.PrefetchScalarGridSpec(
            num_scalar_prefetch=0,
            grid=(grid_b,),
            in_specs=[
                pl.BlockSpec((tb, d_p), lambda i: (i, 0)),   # x: batch-tiled
                resident(),                                  # w_enc
                resident(),                                  # b_enc
                resident(),                                  # w_dec
                resident(),                                  # b_dec
            ],
            out_specs=pl.BlockSpec((tb, d_p), lambda i: (i, 0)),
        ),
        compiler_params=pltpu.CompilerParams(
            dimension_semantics=("parallel",),
            vmem_limit_bytes=vmem_limit,
        ),
        cost_estimate=cost,
    )(x_p, we_p, be_p, wd_p, bd_p)

    return out[:B, :d]


def reference_forward(x, w_enc, b_enc, w_dec, b_dec):
    h = jnp.maximum(x @ w_enc + b_enc, 0.0)
    return jax.nn.sigmoid(h @ w_dec + b_dec)


if __name__ == "__main__":
    # Small shapes implied by the module (deliberately not multiples of 8/128
    # so the padding / batch-tiling paths are exercised: grid of 2 tiles).
    B, d, latent_dim = 200, 48, 24

    key = jax.random.PRNGKey(0)
    k_x, k_we, k_be, k_wd, k_bd = jax.random.split(key, 5)

    x = jax.random.normal(k_x, (B, d), dtype=jnp.float32)

    # Deterministic parameter init (uniform fan-in style, like nn.Linear).
    w_enc = jax.random.uniform(k_we, (d, latent_dim), jnp.float32,
                               minval=-1.0, maxval=1.0) / jnp.sqrt(d)
    b_enc = jax.random.uniform(k_be, (1, latent_dim), jnp.float32,
                               minval=-1.0, maxval=1.0) / jnp.sqrt(d)
    w_dec = jax.random.uniform(k_wd, (latent_dim, d), jnp.float32,
                               minval=-1.0, maxval=1.0) / jnp.sqrt(latent_dim)
    b_dec = jax.random.uniform(k_bd, (1, d), jnp.float32,
                               minval=-1.0, maxval=1.0) / jnp.sqrt(latent_dim)

    ref = reference_forward(x, w_enc, b_enc, w_dec, b_dec)

    # f32 matmul operands: bit-faithful to the PyTorch module semantics.
    # (bf16 operands via compute_dtype=jnp.bfloat16 are recommended on
    #  v6e/v7x; not run here to keep the check fast.)
    out_f32 = jax.block_until_ready(
        autoencoder_forward(x, w_enc, b_enc, w_dec, b_dec))
    assert out_f32.shape == (B, d), out_f32.shape
    max_err = float(jnp.max(jnp.abs(out_f32 - ref)))
    assert jnp.allclose(out_f32, ref, atol=1e-5, rtol=1e-5), max_err

    print("KERNEL_OK")
</pallas_src>

<mosaic_0001>
module attributes {stable_mosaic.version = 11 : i64} {
  func.func @autoencoder_kernel(%arg0: i32, %arg1: memref<128x128xf32, #tpu.memory_space<vmem>>, %arg2: memref<128x128xf32, #tpu.memory_space<vmem>>, %arg3: memref<1x128xf32, #tpu.memory_space<vmem>>, %arg4: memref<128x128xf32, #tpu.memory_space<vmem>>, %arg5: memref<1x128xf32, #tpu.memory_space<vmem>>, %arg6: memref<128x128xf32, #tpu.memory_space<vmem>>) attributes {dimension_semantics = [#tpu.dimension_semantics<parallel>], iteration_bounds = array<i64: 2>, scalar_prefetch = 0 : i64, scratch_operands = 0 : i64, tpu.core_type = #tpu.core_type<tc>, window_params = [{transform_indices = @transform_0, window_bounds = array<i64: 128, 128>}, {pipeline_mode = #tpu.pipeline_mode<synchronous>, transform_indices = @transform_1, window_bounds = array<i64: 128, 128>}, {pipeline_mode = #tpu.pipeline_mode<synchronous>, transform_indices = @transform_2, window_bounds = array<i64: 1, 128>}, {pipeline_mode = #tpu.pipeline_mode<synchronous>, transform_indices = @transform_3, window_bounds = array<i64: 128, 128>}, {pipeline_mode = #tpu.pipeline_mode<synchronous>, transform_indices = @transform_4, window_bounds = array<i64: 1, 128>}, {transform_indices = @transform_5, window_bounds = array<i64: 128, 128>}]} {
    %c0 = arith.constant 0 : index
    %c0_0 = arith.constant 0 : index
    %0 = vector.load %arg1[%c0, %c0_0] : memref<128x128xf32, #tpu.memory_space<vmem>>, vector<128x128xf32>
    %c0_1 = arith.constant 0 : index
    %c0_2 = arith.constant 0 : index
    %1 = vector.load %arg2[%c0_1, %c0_2] : memref<128x128xf32, #tpu.memory_space<vmem>>, vector<128x128xf32>
    %cst = arith.constant dense<0.000000e+00> : vector<128x128xf32>
    %2 = tpu.matmul %0, %1, %cst {dimension_numbers = #tpu.dot_dimension_numbers<[1], [0], [0], [1], [0, 0, 1, 1], [], []>} : vector<128x128xf32>, vector<128x128xf32>, vector<128x128xf32> -> vector<128x128xf32>
    %c0_3 = arith.constant 0 : index
    %c0_4 = arith.constant 0 : index
    %3 = vector.load %arg3[%c0_3, %c0_4] : memref<1x128xf32, #tpu.memory_space<vmem>>, vector<1x128xf32>
    %4 = vector.broadcast %3 : vector<1x128xf32> to vector<128x128xf32>
    %5 = arith.addf %2, %4 : vector<128x128xf32>
    %cst_5 = arith.constant 0.000000e+00 : f32
    %6 = vector.broadcast %cst_5 : f32 to vector<128x128xf32>
    %7 = arith.maximumf %5, %6 : vector<128x128xf32>
    %c0_6 = arith.constant 0 : index
    %c0_7 = arith.constant 0 : index
    %8 = vector.load %arg4[%c0_6, %c0_7] : memref<128x128xf32, #tpu.memory_space<vmem>>, vector<128x128xf32>
    %cst_8 = arith.constant dense<0.000000e+00> : vector<128x128xf32>
    %9 = tpu.matmul %7, %8, %cst_8 {dimension_numbers = #tpu.dot_dimension_numbers<[1], [0], [0], [1], [0, 0, 1, 1], [], []>} : vector<128x128xf32>, vector<128x128xf32>, vector<128x128xf32> -> vector<128x128xf32>
    %c0_9 = arith.constant 0 : index
    %c0_10 = arith.constant 0 : index
    %10 = vector.load %arg5[%c0_9, %c0_10] : memref<1x128xf32, #tpu.memory_space<vmem>>, vector<1x128xf32>
    %11 = vector.broadcast %10 : vector<1x128xf32> to vector<128x128xf32>
    %12 = arith.addf %9, %11 : vector<128x128xf32>
    %13 = arith.negf %12 : vector<128x128xf32>
    %14 = math.exp %13 : vector<128x128xf32>
    %cst_11 = arith.constant 1.000000e+00 : f32
    %15 = vector.broadcast %cst_11 : f32 to vector<128x128xf32>
    %16 = arith.addf %15, %14 : vector<128x128xf32>
    %17 = arith.divf %15, %16 : vector<128x128xf32>
    %c0_12 = arith.constant 0 : index
    %c0_13 = arith.constant 0 : index
    %18 = vector.load %arg6[%c0_12, %c0_13] : memref<128x128xf32, #tpu.memory_space<vmem>>, vector<128x128xf32>
    tpu.vector_store %arg6[%c0_12, %c0_13], %17 {strides = array<i32>} : memref<128x128xf32, #tpu.memory_space<vmem>>, vector<128x128xf32>,
    return
  }
  func.func @transform_0(%arg0: i32) -> (i32, i32) {
    %c0_i32 = arith.constant 0 : i32
    %c0_i32_0 = arith.constant 0 : i32
    return %arg0, %c0_i32 : i32, i32
  }
  func.func @transform_1(%arg0: i32) -> (i32, i32) {
    %c0_i32 = arith.constant 0 : i32
    %c0_i32_0 = arith.constant 0 : i32
    %c0_i32_1 = arith.constant 0 : i32
    return %c0_i32, %c0_i32_0 : i32, i32
  }
  func.func @transform_2(%arg0: i32) -> (i32, i32) {
    %c0_i32 = arith.constant 0 : i32
    %c0_i32_0 = arith.constant 0 : i32
    %c0_i32_1 = arith.constant 0 : i32
    return %c0_i32, %c0_i32_0 : i32, i32
  }
  func.func @transform_3(%arg0: i32) -> (i32, i32) {
    %c0_i32 = arith.constant 0 : i32
    %c0_i32_0 = arith.constant 0 : i32
    %c0_i32_1 = arith.constant 0 : i32
    return %c0_i32, %c0_i32_0 : i32, i32
  }
  func.func @transform_4(%arg0: i32) -> (i32, i32) {
    %c0_i32 = arith.constant 0 : i32
    %c0_i32_0 = arith.constant 0 : i32
    %c0_i32_1 = arith.constant 0 : i32
    return %c0_i32, %c0_i32_0 : i32, i32
  }
  func.func @transform_5(%arg0: i32) -> (i32, i32) {
    %c0_i32 = arith.constant 0 : i32
    %c0_i32_0 = arith.constant 0 : i32
    return %arg0, %c0_i32 : i32, i32
  }
}

</mosaic_0001>

<llo_original>
// kernel: tpu_custom_call.1
$region0: #{tpu_custom_call.1}
  #allocation0 [shape = 'u32[]', space=smem, size = 0x4, offset = 0x4, fixed_abs, tag = 'smem constant byte address 0x4 - core index']
  #allocation1 [shape = 'u32[72,128]{1,0:T(1,128)}', space=vmem, size = 0x9000, scoped, tag = 'internal scratch']
  %s0 = inlined_call_operand.hbm [shape: f32[256,128], index: 0, kind: input, shape index: {}]
  %s1 = inlined_call_operand.hbm [shape: f32[128,128], index: 1, kind: input, shape index: {}]
  %s2 = inlined_call_operand.vmem [shape: f32[1,128], index: 2, kind: input, shape index: {}]
  %s3 = inlined_call_operand.hbm [shape: f32[128,128], index: 3, kind: input, shape index: {}]
  %s4 = inlined_call_operand.vmem [shape: f32[1,128], index: 4, kind: input, shape index: {}]
  %s5 = inlined_call_operand.hbm [shape: f32[256,128], index: 5, kind: output, shape index: {}]
  %s6 = sld [smem:[#allocation0]]
  $region65: #{tpu_custom_call.1} parent=0
    _
  %s8 = ssub.s32 1, %s6
  %s9 = scalar_select 0, %s8, %s6
  $region1: #{tpu_custom_call.1} parent=0
    #allocation2 [shape = 'u8[131072]{0}', space=vmem, size = 0x20000, scoped, tag = 'input window, operand 0']
    #allocation3 [shape = 's32[2]{0}', space=sflag, size = 0x8, scoped, tag = 'scoped memory for tpu_custom_call.1']
    #allocation4 [shape = 's32[2]{0}', space=sflag, size = 0x8, scoped, tag = 'scoped memory for tpu_custom_call.1']
    #allocation5 [shape = 'u8[65536]{0}', space=vmem, size = 0x10000, scoped, tag = 'input window, operand 1, single buffered']
    #allocation6 [shape = 's32[1]{0}', space=sflag, size = 0x4, scoped, tag = 'scoped memory for tpu_custom_call.1']
    #allocation7 [shape = 'u8[65536]{0}', space=vmem, size = 0x10000, scoped, tag = 'input window, operand 3, single buffered']
    #allocation8 [shape = 'u8[131072]{0}', space=vmem, size = 0x20000, scoped, tag = 'output window, operand 0']
    %10 = vsyncpa [#allocation3], 0
    %s11 = scalar_lea.sflag [#allocation3], 1
    %12 = vsyncpa %s11, 0
    %13 = vsyncpa [#allocation6], 0
    %14 = vsyncpa [#allocation4], 0
    %s15 = scalar_lea.sflag [#allocation4], 1
    %16 = vsyncpa %s15, 0
    loop: start=0, step=1, limit=4
    $region2: #{tpu_custom_call.1} parent=1 // loop_pre_header
      _
    $region3: #{tpu_custom_call.1} parent=1 // loop_header
      %s18 = sphi 0, %s22
      %p19 = scmp.ge.s32.totalorder %s18, 4
      %s28 = sphi 0, %s30
      %s31 = sphi 0, %s28
      %s32 = sphi 0, %s31
      %s48 = sphi 0, %s32
      %s52 = sphi 0, %s52
      %s54 = sphi 0, %s52
      %s55 = sphi 0, %s54
      %s69 = sphi 0, %s55
      %s73 = sphi 0, %s73
      %s75 = sphi 0, %s73
      %s76 = sphi 0, %s75
      %s90 = sphi 0, %s76
      %s94 = sphi 0, %s94
      %s96 = sphi 0, %s94
      %s97 = sphi 0, %s96
      %s111 = sphi 0, %s97
      %s115 = sphi 0, %s115
      %s117 = sphi 0, %s115
      %s118 = sphi 0, %s117
      %s132 = sphi 0, %s118
      %s138 = sphi 0, %s140
      %s141 = sphi 0, %s138
      %s142 = sphi 0, %s141
      %s158 = sphi 0, %s142
    $region4: #{tpu_custom_call.1} parent=1 // loop_header_branch
      %21 = sbr.rel (%p19) target = $region8
    $region5: #{tpu_custom_call.1} parent=1 // loop_body
      %s23 = ssub.s32 %s18, 1
      %s24 = ssub.s32 %s18, 2
      %s25 = sadd.s32 %s18, 1
      %s26 = ssub.s32 %s18, %s25
      %p27 = scmp.eq.s32.totalorder %s26, 0
      %s29 = sadd.s32 %s28, 1
      %s30 = scalar_select %p27, %s28, %s29
      %p33 = pneg %p27
      %p34 = scmp.eq.s32.totalorder %s18, 1
      %p35 = por %p33, %p34
      %p36 = scmp.ne.s32.totalorder %s28, %s31
      %p37 = scmp.eq.s32.totalorder %s18, 0
      %p38 = por %p36, %p37
      %p39 = scmp.ne.s32.totalorder %s28, %s31
      %p40 = scmp.eq.s32.totalorder %s23, 1
      %p41 = por %p39, %p40
      %p42 = scmp.ne.s32.totalorder %s31, %s32
      %p43 = scmp.eq.s32.totalorder %s23, 0
      %p44 = por %p42, %p43
      %p45 = scmp.ne.s32.totalorder %s31, %s32
      %p46 = scmp.eq.s32.totalorder %s24, 1
      %p47 = por %p45, %p46
      %p49 = scmp.ne.s32.totalorder %s32, %s48
      %p50 = scmp.eq.s32.totalorder %s24, 0
      %p51 = por %p49, %p50
      %s53 = sadd.s32 %s52, 1
      %p56 = scmp.eq.s32.totalorder %s18, 1
      %p57 = scmp.ne.s32.totalorder %s52, %s54
      %p58 = scmp.eq.s32.totalorder %s18, 0
      %p59 = por %p57, %p58
      %p60 = scmp.ne.s32.totalorder %s52, %s54
      %p61 = scmp.eq.s32.totalorder %s23, 1
      %p62 = por %p60, %p61
      %p63 = scmp.ne.s32.totalorder %s54, %s55
      %p64 = scmp.eq.s32.totalorder %s23, 0
      %p65 = por %p63, %p64
      %p66 = scmp.ne.s32.totalorder %s54, %s55
      %p67 = scmp.eq.s32.totalorder %s24, 1
      %p68 = por %p66, %p67
      %p70 = scmp.ne.s32.totalorder %s55, %s69
      %p71 = scmp.eq.s32.totalorder %s24, 0
      %p72 = por %p70, %p71
      %s74 = sadd.s32 %s73, 1
      %p77 = scmp.eq.s32.totalorder %s18, 1
      %p78 = scmp.ne.s32.totalorder %s73, %s75
      %p79 = scmp.eq.s32.totalorder %s18, 0
      %p80 = por %p78, %p79
      %p81 = scmp.ne.s32.totalorder %s73, %s75
      %p82 = scmp.eq.s32.totalorder %s23, 1
      %p83 = por %p81, %p82
      %p84 = scmp.ne.s32.totalorder %s75, %s76
      %p85 = scmp.eq.s32.totalorder %s23, 0
      %p86 = por %p84, %p85
      %p87 = scmp.ne.s32.totalorder %s75, %s76
      %p88 = scmp.eq.s32.totalorder %s24, 1
      %p89 = por %p87, %p88
      %p91 = scmp.ne.s32.totalorder %s76, %s90
      %p92 = scmp.eq.s32.totalorder %s24, 0
      %p93 = por %p91, %p92
      %s95 = sadd.s32 %s94, 1
      %p98 = scmp.eq.s32.totalorder %s18, 1
      %p99 = scmp.ne.s32.totalorder %s94, %s96
      %p100 = scmp.eq.s32.totalorder %s18, 0
      %p101 = por %p99, %p100
      %p102 = scmp.ne.s32.totalorder %s94, %s96
      %p103 = scmp.eq.s32.totalorder %s23, 1
      %p104 = por %p102, %p103
      %p105 = scmp.ne.s32.totalorder %s96, %s97
      %p106 = scmp.eq.s32.totalorder %s23, 0
      %p107 = por %p105, %p106
      %p108 = scmp.ne.s32.totalorder %s96, %s97
      %p109 = scmp.eq.s32.totalorder %s24, 1
      %p110 = por %p108, %p109
      %p112 = scmp.ne.s32.totalorder %s97, %s111
      %p113 = scmp.eq.s32.totalorder %s24, 0
      %p114 = por %p112, %p113
      %s116 = sadd.s32 %s115, 1
      %p119 = scmp.eq.s32.totalorder %s18, 1
      %p120 = scmp.ne.s32.totalorder %s115, %s117
      %p121 = scmp.eq.s32.totalorder %s18, 0
      %p122 = por %p120, %p121
      %p123 = scmp.ne.s32.totalorder %s115, %s117
      %p124 = scmp.eq.s32.totalorder %s23, 1
      %p125 = por %p123, %p124
      %p126 = scmp.ne.s32.totalorder %s117, %s118
      %p127 = scmp.eq.s32.totalorder %s23, 0
      %p128 = por %p126, %p127
      %p129 = scmp.ne.s32.totalorder %s117, %s118
      %p130 = scmp.eq.s32.totalorder %s24, 1
      %p131 = por %p129, %p130
      %p133 = scmp.ne.s32.totalorder %s118, %s132
      %p134 = scmp.eq.s32.totalorder %s24, 0
      %p135 = por %p133, %p134
      %s136 = ssub.s32 %s18, %s25
      %p137 = scmp.eq.s32.totalorder %s136, 0
      %s139 = sadd.s32 %s138, 1
      %s140 = scalar_select %p137, %s138, %s139
      %p143 = pneg %p137
      %p144 = scmp.eq.s32.totalorder %s18, 1
      %p145 = por %p143, %p144
      %p146 = scmp.ne.s32.totalorder %s138, %s141
      %p147 = scmp.eq.s32.totalorder %s18, 0
      %p148 = por %p146, %p147
      %p149 = scmp.ne.s32.totalorder %s138, %s141
      %p150 = scmp.eq.s32.totalorder %s23, 1
      %p151 = por %p149, %p150
      %p152 = scmp.ne.s32.totalorder %s141, %s142
      %p153 = scmp.eq.s32.totalorder %s23, 0
      %p154 = por %p152, %p153
      %p155 = scmp.ne.s32.totalorder %s141, %s142
      %p156 = scmp.eq.s32.totalorder %s24, 1
      %p157 = por %p155, %p156
      %p159 = scmp.ne.s32.totalorder %s142, %s158
      %p160 = scmp.eq.s32.totalorder %s24, 0
      %p161 = por %p159, %p160
      %p162 = scmp.le.s32.totalorder 1, %s18
      %p163 = scmp.lt.s32.totalorder %s18, 3
      %p164 = pnand %p162, %p163
      %p165 = pneg %p164
      // Predicated region
      $region9: #{tpu_custom_call.1} parent=5 // pred_check
        _
      $region10: #{tpu_custom_call.1} parent=5 // pred_check_branch
        %167 = sbr.rel (%p164) target = $region12
      $region11: #{tpu_custom_call.1} parent=5 // pred_region
        %s168 = ssub.s32 %s18, 1
        // Predicated region
        $region13: #{tpu_custom_call.1} parent=11 // pred_check
          %p169 = pneg %p65
        $region14: #{tpu_custom_call.1} parent=11 // pred_check_branch
          %171 = sbr.rel (%p169) target = $region16
        $region15: #{tpu_custom_call.1} parent=11 // pred_region
          %173 = vsyncadd [#allocation6], 0
          %s174 = sshll.u32 %s1, 4
          %s175 = int_to_ptr.hbm [resolvable:$true] %s174
          %s176 = sshll.u32 [#allocation5], 4
          %s177 = int_to_ptr.vmem [resolvable:$true] %s176
          %182 = dma.hbm_to_vmem [thread:$0]  %s175, 2048, %s177, [#allocation6], 128, 128, 8
        $region16: #{tpu_custom_call.1} parent=11 // pred_fallthru
          _
        // Predicated region
        $region17: #{tpu_custom_call.1} parent=11 // pred_check
          %p183 = pneg %p86
        $region18: #{tpu_custom_call.1} parent=11 // pred_check_branch
          %185 = sbr.rel (%p183) target = $region20
        $region19: #{tpu_custom_call.1} parent=11 // pred_region
          _
        $region20: #{tpu_custom_call.1} parent=11 // pred_fallthru
          _
        // Predicated region
        $region21: #{tpu_custom_call.1} parent=11 // pred_check
          %p186 = pneg %p107
        $region22: #{tpu_custom_call.1} parent=11 // pred_check_branch
          %188 = sbr.rel (%p186) target = $region24
        $region23: #{tpu_custom_call.1} parent=11 // pred_region
          %190 = vsyncadd [#allocation6], 0
          %s191 = sshll.u32 %s3, 4
          %s192 = int_to_ptr.hbm [resolvable:$true] %s191
          %s193 = sshll.u32 [#allocation7], 4
          %s194 = int_to_ptr.vmem [resolvable:$true] %s193
          %199 = dma.hbm_to_vmem [thread:$0]  %s192, 2048, %s194, [#allocation6], 128, 128, 8
        $region24: #{tpu_custom_call.1} parent=11 // pred_fallthru
          _
        // Predicated region
        $region25: #{tpu_custom_call.1} parent=11 // pred_check
          %p200 = pneg %p128
        $region26: #{tpu_custom_call.1} parent=11 // pred_check_branch
          %202 = sbr.rel (%p200) target = $region28
        $region27: #{tpu_custom_call.1} parent=11 // pred_region
          _
        $region28: #{tpu_custom_call.1} parent=11 // pred_fallthru
          _
      $region12: #{tpu_custom_call.1} parent=5 // pred_fallthru
        _
      %p203 = scmp.lt.s32.totalorder %s18, 2
      // Predicated region
      $region29: #{tpu_custom_call.1} parent=5 // pred_check
        %p204 = pneg %p203
      $region30: #{tpu_custom_call.1} parent=5 // pred_check_branch
        %206 = sbr.rel (%p204) target = $region32
      $region31: #{tpu_custom_call.1} parent=5 // pred_region
        // Predicated region
        $region33: #{tpu_custom_call.1} parent=31 // pred_check
          %p207 = pneg %p38
        $region34: #{tpu_custom_call.1} parent=31 // pred_check_branch
          %209 = sbr.rel (%p207) target = $region36
        $region35: #{tpu_custom_call.1} parent=31 // pred_region
          %s210 = sand.u32 %s28, 1
          %s211 = scalar_lea.sflag [#allocation3], %s210
          %s212 = sand.u32 %s28, 1
          %s213 = smul.addr %s212, 128
          %s214 = scalar_lea.vmem [#allocation2], %s213
          %s215 = smul.u32 16, %s18
          %217 = vsyncadd %s211, 0
          %s218 = smul.addr %s215, 8
          %s219 = scalar_lea.hbm %s0, %s218
          %s220 = sshll.u32 %s219, 4
          %s221 = int_to_ptr.hbm [resolvable:$true] %s220
          %s222 = sshll.u32 %s214, 4
          %s223 = int_to_ptr.vmem [resolvable:$true] %s222
          %228 = dma.hbm_to_vmem [thread:$0]  %s221, 2048, %s223, %s211, 128, 128, 8
        $region36: #{tpu_custom_call.1} parent=31 // pred_fallthru
          _
      $region32: #{tpu_custom_call.1} parent=5 // pred_fallthru
        _
      %p229 = scmp.le.s32.totalorder 1, %s18
      %p230 = scmp.lt.s32.totalorder %s18, 3
      %p231 = pnand %p229, %p230
      %p232 = pneg %p231
      // Predicated region
      $region37: #{tpu_custom_call.1} parent=5 // pred_check
        _
      $region38: #{tpu_custom_call.1} parent=5 // pred_check_branch
        %234 = sbr.rel (%p231) target = $region40
      $region39: #{tpu_custom_call.1} parent=5 // pred_region
        %s235 = ssub.s32 %s18, 1
        %s236 = sand.u32 %s31, 1
        %s237 = scalar_lea.sflag [#allocation3], %s236
        %s238 = sand.u32 %s31, 1
        %s239 = smul.addr %s238, 128
        %s240 = scalar_lea.vmem [#allocation2], %s239
        // Predicated region
        $region41: #{tpu_custom_call.1} parent=39 // pred_check
          %p241 = pneg %p44
        $region42: #{tpu_custom_call.1} parent=39 // pred_check_branch
          %243 = sbr.rel (%p241) target = $region44
        $region43: #{tpu_custom_call.1} parent=39 // pred_region
          %245 = dma.done %s237, 2048
        $region44: #{tpu_custom_call.1} parent=39 // pred_fallthru
          _
        // Predicated region
        $region45: #{tpu_custom_call.1} parent=39 // pred_check
          %p246 = pneg %p65
        $region46: #{tpu_custom_call.1} parent=39 // pred_check_branch
          %248 = sbr.rel (%p246) target = $region48
        $region47: #{tpu_custom_call.1} parent=39 // pred_region
          %250 = dma.done [#allocation6], 2048
        $region48: #{tpu_custom_call.1} parent=39 // pred_fallthru
          _
        // Predicated region
        $region49: #{tpu_custom_call.1} parent=39 // pred_check
          %p251 = pneg %p107
        $region50: #{tpu_custom_call.1} parent=39 // pred_check_branch
          %253 = sbr.rel (%p251) target = $region52
        $region51: #{tpu_custom_call.1} parent=39 // pred_region
          %255 = dma.done [#allocation6], 2048
        $region52: #{tpu_custom_call.1} parent=39 // pred_fallthru
          _
        %s256 = sand.u32 %s31, 1
        %s257 = scalar_lea.sflag [#allocation3], %s256
        %s258 = sand.u32 %s31, 1
        %s259 = smul.addr %s258, 128
        %s260 = scalar_lea.vmem [#allocation2], %s259
        %p261 = pneg %p44
        %p262 = pneg %p41
        %p263 = pneg %p65
        %p264 = pneg %p62
        %p265 = pneg %p86
        %p266 = pneg %p83
        %p267 = pneg %p107
        %p268 = pneg %p104
        %p269 = pneg %p128
        %p270 = pneg %p125
        %p271 = pneg %p154
        %p272 = pneg %p151
        %s273 = sand.u32 %s141, 1
        %s274 = scalar_lea.sflag [#allocation4], %s273
        %s275 = sand.u32 %s141, 1
        %s276 = smul.addr %s275, 128
        %s277 = scalar_lea.vmem [#allocation8], %s276
        %s278 = smul.u32 16, %s23
        %s279 = smul.u32 16, %s23
        %v280 = vld [vmem:[%s240] sm:$0xff]
        %v281 = vld [vmem:[%s240 + $0x8] sm:$0xff]
        %v282 = vld [vmem:[%s240 + $0x10] sm:$0xff]
        %v283 = vld [vmem:[%s240 + $0x18] sm:$0xff]
        %v284 = vld [vmem:[%s240 + $0x20] sm:$0xff]
        %v285 = vld [vmem:[%s240 + $0x28] sm:$0xff]
        %v286 = vld [vmem:[%s240 + $0x30] sm:$0xff]
        %v287 = vld [vmem:[%s240 + $0x38] sm:$0xff]
        %v288 = vld [vmem:[%s240 + $0x40] sm:$0xff]
        %v289 = vld [vmem:[%s240 + $0x48] sm:$0xff]
        %v290 = vld [vmem:[%s240 + $0x50] sm:$0xff]
        %v291 = vld [vmem:[%s240 + $0x58] sm:$0xff]
        %v292 = vld [vmem:[%s240 + $0x60] sm:$0xff]
        %v293 = vld [vmem:[%s240 + $0x68] sm:$0xff]
        %v294 = vld [vmem:[%s240 + $0x70] sm:$0xff]
        %v295 = vld [vmem:[%s240 + $0x78] sm:$0xff]
        %v296 = vld [vmem:[#allocation5] sm:$0xff]
        %v297 = vld [vmem:[#allocation5 + $0x8] sm:$0xff]
        %v298 = vld [vmem:[#allocation5 + $0x10] sm:$0xff]
        %v299 = vld [vmem:[#allocation5 + $0x18] sm:$0xff]
        %v300 = vld [vmem:[#allocation5 + $0x20] sm:$0xff]
        %v301 = vld [vmem:[#allocation5 + $0x28] sm:$0xff]
        %v302 = vld [vmem:[#allocation5 + $0x30] sm:$0xff]
        %v303 = vld [vmem:[#allocation5 + $0x38] sm:$0xff]
        %v304 = vld [vmem:[#allocation5 + $0x40] sm:$0xff]
        %v305 = vld [vmem:[#allocation5 + $0x48] sm:$0xff]
        %v306 = vld [vmem:[#allocation5 + $0x50] sm:$0xff]
        %v307 = vld [vmem:[#allocation5 + $0x58] sm:$0xff]
        %v308 = vld [vmem:[#allocation5 + $0x60] sm:$0xff]
        %v309 = vld [vmem:[#allocation5 + $0x68] sm:$0xff]
        %v310 = vld [vmem:[#allocation5 + $0x70] sm:$0xff]
        %v311 = vld [vmem:[#allocation5 + $0x78] sm:$0xff]
        %v312 = vld [vmem:[%s2] sm:$0x1]
        %v314 = vperm.slane %v312, 0
        %316 = vmatpush.msra.mxu0 %v311
        %317 = vmatpush.msra.mxu0 %v310
        %318 = vmatpush.msra.mxu0 %v309
        %319 = vmatpush.msra.mxu0 %v308
        %320 = vmatpush.msra.mxu0 %v307
        %321 = vmatpush.msra.mxu0 %v306
        %322 = vmatpush.msra.mxu0 %v305
        %323 = vmatpush.msra.mxu0 %v304
        %324 = vmatpush.msra.mxu0 %v303
        %325 = vmatpush.msra.mxu0 %v302
        %326 = vmatpush.msra.mxu0 %v301
        %327 = vmatpush.msra.mxu0 %v300
        %328 = vmatpush.msra.mxu0 %v299
        %329 = vmatpush.msra.mxu0 %v298
        %330 = vmatpush.msra.mxu0 %v297
        %331 = vmatpush.msra.mxu0 %v296
        %332 = vmatmul.f32.gmra.mxu0 %v280
        %v333 = vpop.f32.mrf.mxu0
        %v334 = vadd.f32 %v314, %v333
        %335 = vmatmul.f32.gmra.mxu0 %v281
        %v336 = vpop.f32.mrf.mxu0
        %v337 = vadd.f32 %v314, %v336
        %338 = vmatmul.f32.gmra.mxu0 %v282
        %v339 = vpop.f32.mrf.mxu0
        %v340 = vadd.f32 %v314, %v339
        %341 = vmatmul.f32.gmra.mxu0 %v283
        %v342 = vpop.f32.mrf.mxu0
        %v343 = vadd.f32 %v314, %v342
        %344 = vmatmul.f32.gmra.mxu0 %v284
        %v345 = vpop.f32.mrf.mxu0
        %v346 = vadd.f32 %v314, %v345
        %347 = vmatmul.f32.gmra.mxu0 %v285
        %v348 = vpop.f32.mrf.mxu0
        %v349 = vadd.f32 %v314, %v348
        %350 = vmatmul.f32.gmra.mxu0 %v286
        %v351 = vpop.f32.mrf.mxu0
        %v352 = vadd.f32 %v314, %v351
        %353 = vmatmul.f32.gmra.mxu0 %v287
        %v354 = vpop.f32.mrf.mxu0
        %v355 = vadd.f32 %v314, %v354
        %356 = vmatmul.f32.gmra.mxu0 %v288
        %v357 = vpop.f32.mrf.mxu0
        %v358 = vadd.f32 %v314, %v357
        %359 = vmatmul.f32.gmra.mxu0 %v289
        %v360 = vpop.f32.mrf.mxu0
        %v361 = vadd.f32 %v314, %v360
        %362 = vmatmul.f32.gmra.mxu0 %v290
        %v363 = vpop.f32.mrf.mxu0
        %v364 = vadd.f32 %v314, %v363
        %365 = vmatmul.f32.gmra.mxu0 %v291
        %v366 = vpop.f32.mrf.mxu0
        %v367 = vadd.f32 %v314, %v366
        %368 = vmatmul.f32.gmra.mxu0 %v292
        %v369 = vpop.f32.mrf.mxu0
        %v370 = vadd.f32 %v314, %v369
        %371 = vmatmul.f32.gmra.mxu0 %v293
        %v372 = vpop.f32.mrf.mxu0
        %v373 = vadd.f32 %v314, %v372
        %374 = vmatmul.f32.gmra.mxu0 %v294
        %v375 = vpop.f32.mrf.mxu0
        %v376 = vadd.f32 %v314, %v375
        %377 = vmatmul.f32.gmra.mxu0 %v295
        %v378 = vpop.f32.mrf.mxu0
        %v379 = vadd.f32 %v314, %v378
        %380 = vdwg.mxu0
        %v381 = vmax.f32 %v334, 0.0
        %v382 = vmax.f32 %v337, 0.0
        %v383 = vmax.f32 %v340, 0.0
        %v384 = vmax.f32 %v343, 0.0
        %v385 = vmax.f32 %v346, 0.0
        %v386 = vmax.f32 %v349, 0.0
        %v387 = vmax.f32 %v352, 0.0
        %v388 = vmax.f32 %v355, 0.0
        %v389 = vmax.f32 %v358, 0.0
        %v390 = vmax.f32 %v361, 0.0
        %v391 = vmax.f32 %v364, 0.0
        %v392 = vmax.f32 %v367, 0.0
        %v393 = vmax.f32 %v370, 0.0
        %v394 = vmax.f32 %v373, 0.0
        %v395 = vmax.f32 %v376, 0.0
        %v396 = vmax.f32 %v379, 0.0
        %v397 = vld [vmem:[#allocation7] sm:$0xff]
        %v398 = vld [vmem:[#allocation7 + $0x8] sm:$0xff]
        %v399 = vld [vmem:[#allocation7 + $0x10] sm:$0xff]
        %v400 = vld [vmem:[#allocation7 + $0x18] sm:$0xff]
        %v401 = vld [vmem:[#allocation7 + $0x20] sm:$0xff]
        %v402 = vld [vmem:[#allocation7 + $0x28] sm:$0xff]
        %v403 = vld [vmem:[#allocation7 + $0x30] sm:$0xff]
        %v404 = vld [vmem:[#allocation7 + $0x38] sm:$0xff]
        %v405 = vld [vmem:[#allocation7 + $0x40] sm:$0xff]
        %v406 = vld [vmem:[#allocation7 + $0x48] sm:$0xff]
        %v407 = vld [vmem:[#allocation7 + $0x50] sm:$0xff]
        %v408 = vld [vmem:[#allocation7 + $0x58] sm:$0xff]
        %v409 = vld [vmem:[#allocation7 + $0x60] sm:$0xff]
        %v410 = vld [vmem:[#allocation7 + $0x68] sm:$0xff]
        %v411 = vld [vmem:[#allocation7 + $0x70] sm:$0xff]
        %v412 = vld [vmem:[#allocation7 + $0x78] sm:$0xff]
        %v413 = vld [vmem:[%s4] sm:$0x1]
        %v415 = vperm.slane %v413, 0
        %417 = vmatpush.msra.mxu0 %v412
        %418 = vmatpush.msra.mxu0 %v411
        %419 = vmatpush.msra.mxu0 %v410
        %420 = vmatpush.msra.mxu0 %v409
        %421 = vmatpush.msra.mxu0 %v408
        %422 = vmatpush.msra.mxu0 %v407
        %423 = vmatpush.msra.mxu0 %v406
        %424 = vmatpush.msra.mxu0 %v405
        %425 = vmatpush.msra.mxu0 %v404
        %426 = vmatpush.msra.mxu0 %v403
        %427 = vmatpush.msra.mxu0 %v402
        %428 = vmatpush.msra.mxu0 %v401
        %429 = vmatpush.msra.mxu0 %v400
        %430 = vmatpush.msra.mxu0 %v399
        %431 = vmatpush.msra.mxu0 %v398
        %432 = vmatpush.msra.mxu0 %v397
        %433 = vmatmul.f32.gmra.mxu0 %v381
        %v434 = vpop.f32.mrf.mxu0
        %v435 = vadd.f32 %v415, %v434
        %436 = vmatmul.f32.gmra.mxu0 %v382
        %v437 = vpop.f32.mrf.mxu0
        %v438 = vadd.f32 %v415, %v437
        %439 = vmatmul.f32.gmra.mxu0 %v383
        %v440 = vpop.f32.mrf.mxu0
        %v441 = vadd.f32 %v415, %v440
        %442 = vmatmul.f32.gmra.mxu0 %v384
        %v443 = vpop.f32.mrf.mxu0
        %v444 = vadd.f32 %v415, %v443
        %445 = vmatmul.f32.gmra.mxu0 %v385
        %v446 = vpop.f32.mrf.mxu0
        %v447 = vadd.f32 %v415, %v446
        %448 = vmatmul.f32.gmra.mxu0 %v386
        %v449 = vpop.f32.mrf.mxu0
        %v450 = vadd.f32 %v415, %v449
        %451 = vmatmul.f32.gmra.mxu0 %v387
        %v452 = vpop.f32.mrf.mxu0
        %v453 = vadd.f32 %v415, %v452
        %454 = vmatmul.f32.gmra.mxu0 %v388
        %v455 = vpop.f32.mrf.mxu0
        %v456 = vadd.f32 %v415, %v455
        %457 = vmatmul.f32.gmra.mxu0 %v389
        %v458 = vpop.f32.mrf.mxu0
        %v459 = vadd.f32 %v415, %v458
        %460 = vmatmul.f32.gmra.mxu0 %v390
        %v461 = vpop.f32.mrf.mxu0
        %v462 = vadd.f32 %v415, %v461
        %463 = vmatmul.f32.gmra.mxu0 %v391
        %v464 = vpop.f32.mrf.mxu0
        %v465 = vadd.f32 %v415, %v464
        %466 = vmatmul.f32.gmra.mxu0 %v392
        %v467 = vpop.f32.mrf.mxu0
        %v468 = vadd.f32 %v415, %v467
        %469 = vmatmul.f32.gmra.mxu0 %v393
        %v470 = vpop.f32.mrf.mxu0
        %v471 = vadd.f32 %v415, %v470
        %472 = vmatmul.f32.gmra.mxu0 %v394
        %v473 = vpop.f32.mrf.mxu0
        %v474 = vadd.f32 %v415, %v473
        %475 = vmatmul.f32.gmra.mxu0 %v395
        %v476 = vpop.f32.mrf.mxu0
        %v477 = vadd.f32 %v415, %v476
        %478 = vmatmul.f32.gmra.mxu0 %v396
        %v479 = vpop.f32.mrf.mxu0
        %v480 = vadd.f32 %v415, %v479
        %481 = vdwg.mxu0
        %v482 = vxor.u32 %v435, 2147483648
        %v483 = vxor.u32 %v438, 2147483648
        %v484 = vxor.u32 %v441, 2147483648
        %v485 = vxor.u32 %v444, 2147483648
        %v486 = vxor.u32 %v447, 2147483648
        %v487 = vxor.u32 %v450, 2147483648
        %v488 = vxor.u32 %v453, 2147483648
        %v489 = vxor.u32 %v456, 2147483648
        %v490 = vxor.u32 %v459, 2147483648
        %v491 = vxor.u32 %v462, 2147483648
        %v492 = vxor.u32 %v465, 2147483648
        %v493 = vxor.u32 %v468, 2147483648
        %v494 = vxor.u32 %v471, 2147483648
        %v495 = vxor.u32 %v474, 2147483648
        %v496 = vxor.u32 %v477, 2147483648
        %v497 = vxor.u32 %v480, 2147483648
        %v498 = vmul.f32 %v482, 1.442695
        %v499 = vpow.pop %v498
        %v500 = vmul.f32 %v483, 1.442695
        %v501 = vpow.pop %v500
        %v502 = vmul.f32 %v484, 1.442695
        %v503 = vpow.pop %v502
        %v504 = vmul.f32 %v485, 1.442695
        %v505 = vpow.pop %v504
        %v506 = vmul.f32 %v486, 1.442695
        %v507 = vpow.pop %v506
        %v508 = vmul.f32 %v487, 1.442695
        %v509 = vpow.pop %v508
        %v510 = vmul.f32 %v488, 1.442695
        %v511 = vpow.pop %v510
        %v512 = vmul.f32 %v489, 1.442695
        %v513 = vpow.pop %v512
        %v514 = vmul.f32 %v490, 1.442695
        %v515 = vpow.pop %v514
        %v516 = vmul.f32 %v491, 1.442695
        %v517 = vpow.pop %v516
        %v518 = vmul.f32 %v492, 1.442695
        %v519 = vpow.pop %v518
        %v520 = vmul.f32 %v493, 1.442695
        %v521 = vpow.pop %v520
        %v522 = vmul.f32 %v494, 1.442695
        %v523 = vpow.pop %v522
        %v524 = vmul.f32 %v495, 1.442695
        %v525 = vpow.pop %v524
        %v526 = vmul.f32 %v496, 1.442695
        %v527 = vpow.pop %v526
        %v528 = vmul.f32 %v497, 1.442695
        %v529 = vpow.pop %v528
        %v530 = vadd.f32 %v499, 1.0
        %v531 = vadd.f32 %v501, 1.0
        %v532 = vadd.f32 %v503, 1.0
        %v533 = vadd.f32 %v505, 1.0
        %v534 = vadd.f32 %v507, 1.0
        %v535 = vadd.f32 %v509, 1.0
        %v536 = vadd.f32 %v511, 1.0
        %v537 = vadd.f32 %v513, 1.0
        %v538 = vadd.f32 %v515, 1.0
        %v539 = vadd.f32 %v517, 1.0
        %v540 = vadd.f32 %v519, 1.0
        %v541 = vadd.f32 %v521, 1.0
        %v542 = vadd.f32 %v523, 1.0
        %v543 = vadd.f32 %v525, 1.0
        %v544 = vadd.f32 %v527, 1.0
        %v545 = vadd.f32 %v529, 1.0
        %v546 = vrcp.pop %v530
        %v547 = vmul.f32 %v530, %v546
        %v548 = vsub.f32 1.0, %v547
        %v549 = vmul.f32 %v546, %v548
        %v550 = vadd.f32 %v546, %v549
        %vm551 = vweird.f32 %v530
        %vm552 = vweird.f32 %v546
        %vm553 = vmor %vm551, %vm552
        %v554 = vsel %vm553, %v546, %v550
        %v555 = vand.u32 2147483647, %v530
        %vm556 = vcmp.eq.f32.partialorder %v555, 8.507059e+37
        %v557 = vand.u32 %v530, 2147483648
        %v558 = vor.u32 1.1754944e-38, %v557
        %v559 = vsel %vm556, %v558, %v554
        %v560 = vmul.f32 1.0, %v559
        %v561 = vrcp.pop %v531
        %v562 = vmul.f32 %v531, %v561
        %v563 = vsub.f32 1.0, %v562
        %v564 = vmul.f32 %v561, %v563
        %v565 = vadd.f32 %v561, %v564
        %vm566 = vweird.f32 %v531
        %vm567 = vweird.f32 %v561
        %vm568 = vmor %vm566, %vm567
        %v569 = vsel %vm568, %v561, %v565
        %v570 = vand.u32 2147483647, %v531
        %vm571 = vcmp.eq.f32.partialorder %v570, 8.507059e+37
        %v572 = vand.u32 %v531, 2147483648
        %v573 = vor.u32 1.1754944e-38, %v572
        %v574 = vsel %vm571, %v573, %v569
        %v575 = vmul.f32 1.0, %v574
        %v576 = vrcp.pop %v532
        %v577 = vmul.f32 %v532, %v576
        %v578 = vsub.f32 1.0, %v577
        %v579 = vmul.f32 %v576, %v578
        %v580 = vadd.f32 %v576, %v579
        %vm581 = vweird.f32 %v532
        %vm582 = vweird.f32 %v576
        %vm583 = vmor %vm581, %vm582
        %v584 = vsel %vm583, %v576, %v580
        %v585 = vand.u32 2147483647, %v532
        %vm586 = vcmp.eq.f32.partialorder %v585, 8.507059e+37
        %v587 = vand.u32 %v532, 2147483648
        %v588 = vor.u32 1.1754944e-38, %v587
        %v589 = vsel %vm586, %v588, %v584
        %v590 = vmul.f32 1.0, %v589
        %v591 = vrcp.pop %v533
        %v592 = vmul.f32 %v533, %v591
        %v593 = vsub.f32 1.0, %v592
        %v594 = vmul.f32 %v591, %v593
        %v595 = vadd.f32 %v591, %v594
        %vm596 = vweird.f32 %v533
        %vm597 = vweird.f32 %v591
        %vm598 = vmor %vm596, %vm597
        %v599 = vsel %vm598, %v591, %v595
        %v600 = vand.u32 2147483647, %v533
        %vm601 = vcmp.eq.f32.partialorder %v600, 8.507059e+37
        %v602 = vand.u32 %v533, 2147483648
        %v603 = vor.u32 1.1754944e-38, %v602
        %v604 = vsel %vm601, %v603, %v599
        %v605 = vmul.f32 1.0, %v604
        %v606 = vrcp.pop %v534
        %v607 = vmul.f32 %v534, %v606
        %v608 = vsub.f32 1.0, %v607
        %v609 = vmul.f32 %v606, %v608
        %v610 = vadd.f32 %v606, %v609
        %vm611 = vweird.f32 %v534
        %vm612 = vweird.f32 %v606
        %vm613 = vmor %vm611, %vm612
        %v614 = vsel %vm613, %v606, %v610
        %v615 = vand.u32 2147483647, %v534
        %vm616 = vcmp.eq.f32.partialorder %v615, 8.507059e+37
        %v617 = vand.u32 %v534, 2147483648
        %v618 = vor.u32 1.1754944e-38, %v617
        %v619 = vsel %vm616, %v618, %v614
        %v620 = vmul.f32 1.0, %v619
        %v621 = vrcp.pop %v535
        %v622 = vmul.f32 %v535, %v621
        %v623 = vsub.f32 1.0, %v622
        %v624 = vmul.f32 %v621, %v623
        %v625 = vadd.f32 %v621, %v624
        %vm626 = vweird.f32 %v535
        %vm627 = vweird.f32 %v621
        %vm628 = vmor %vm626, %vm627
        %v629 = vsel %vm628, %v621, %v625
        %v630 = vand.u32 2147483647, %v535
        %vm631 = vcmp.eq.f32.partialorder %v630, 8.507059e+37
        %v632 = vand.u32 %v535, 2147483648
        %v633 = vor.u32 1.1754944e-38, %v632
        %v634 = vsel %vm631, %v633, %v629
        %v635 = vmul.f32 1.0, %v634
        %v636 = vrcp.pop %v536
        %v637 = vmul.f32 %v536, %v636
        %v638 = vsub.f32 1.0, %v637
        %v639 = vmul.f32 %v636, %v638
        %v640 = vadd.f32 %v636, %v639
        %vm641 = vweird.f32 %v536
        %vm642 = vweird.f32 %v636
        %vm643 = vmor %vm641, %vm642
        %v644 = vsel %vm643, %v636, %v640
        %v645 = vand.u32 2147483647, %v536
        %vm646 = vcmp.eq.f32.partialorder %v645, 8.507059e+37
        %v647 = vand.u32 %v536, 2147483648
        %v648 = vor.u32 1.1754944e-38, %v647
        %v649 = vsel %vm646, %v648, %v644
        %v650 = vmul.f32 1.0, %v649
        %v651 = vrcp.pop %v537
        %v652 = vmul.f32 %v537, %v651
        %v653 = vsub.f32 1.0, %v652
        %v654 = vmul.f32 %v651, %v653
        %v655 = vadd.f32 %v651, %v654
        %vm656 = vweird.f32 %v537
        %vm657 = vweird.f32 %v651
        %vm658 = vmor %vm656, %vm657
        %v659 = vsel %vm658, %v651, %v655
        %v660 = vand.u32 2147483647, %v537
        %vm661 = vcmp.eq.f32.partialorder %v660, 8.507059e+37
        %v662 = vand.u32 %v537, 2147483648
        %v663 = vor.u32 1.1754944e-38, %v662
        %v664 = vsel %vm661, %v663, %v659
        %v665 = vmul.f32 1.0, %v664
        %v666 = vrcp.pop %v538
        %v667 = vmul.f32 %v538, %v666
        %v668 = vsub.f32 1.0, %v667
        %v669 = vmul.f32 %v666, %v668
        %v670 = vadd.f32 %v666, %v669
        %vm671 = vweird.f32 %v538
        %vm672 = vweird.f32 %v666
        %vm673 = vmor %vm671, %vm672
        %v674 = vsel %vm673, %v666, %v670
        %v675 = vand.u32 2147483647, %v538
        %vm676 = vcmp.eq.f32.partialorder %v675, 8.507059e+37
        %v677 = vand.u32 %v538, 2147483648
        %v678 = vor.u32 1.1754944e-38, %v677
        %v679 = vsel %vm676, %v678, %v674
        %v680 = vmul.f32 1.0, %v679
        %v681 = vrcp.pop %v539
        %v682 = vmul.f32 %v539, %v681
        %v683 = vsub.f32 1.0, %v682
        %v684 = vmul.f32 %v681, %v683
        %v685 = vadd.f32 %v681, %v684
        %vm686 = vweird.f32 %v539
        %vm687 = vweird.f32 %v681
        %vm688 = vmor %vm686, %vm687
        %v689 = vsel %vm688, %v681, %v685
        %v690 = vand.u32 2147483647, %v539
        %vm691 = vcmp.eq.f32.partialorder %v690, 8.507059e+37
        %v692 = vand.u32 %v539, 2147483648
        %v693 = vor.u32 1.1754944e-38, %v692
        %v694 = vsel %vm691, %v693, %v689
        %v695 = vmul.f32 1.0, %v694
        %v696 = vrcp.pop %v540
        %v697 = vmul.f32 %v540, %v696
        %v698 = vsub.f32 1.0, %v697
        %v699 = vmul.f32 %v696, %v698
        %v700 = vadd.f32 %v696, %v699
        %vm701 = vweird.f32 %v540
        %vm702 = vweird.f32 %v696
        %vm703 = vmor %vm701, %vm702
        %v704 = vsel %vm703, %v696, %v700
        %v705 = vand.u32 2147483647, %v540
        %vm706 = vcmp.eq.f32.partialorder %v705, 8.507059e+37
        %v707 = vand.u32 %v540, 2147483648
        %v708 = vor.u32 1.1754944e-38, %v707
        %v709 = vsel %vm706, %v708, %v704
        %v710 = vmul.f32 1.0, %v709
        %v711 = vrcp.pop %v541
        %v712 = vmul.f32 %v541, %v711
        %v713 = vsub.f32 1.0, %v712
        %v714 = vmul.f32 %v711, %v713
        %v715 = vadd.f32 %v711, %v714
        %vm716 = vweird.f32 %v541
        %vm717 = vweird.f32 %v711
        %vm718 = vmor %vm716, %vm717
        %v719 = vsel %vm718, %v711, %v715
        %v720 = vand.u32 2147483647, %v541
        %vm721 = vcmp.eq.f32.partialorder %v720, 8.507059e+37
        %v722 = vand.u32 %v541, 2147483648
        %v723 = vor.u32 1.1754944e-38, %v722
        %v724 = vsel %vm721, %v723, %v719
        %v725 = vmul.f32 1.0, %v724
        %v726 = vrcp.pop %v542
        %v727 = vmul.f32 %v542, %v726
        %v728 = vsub.f32 1.0, %v727
        %v729 = vmul.f32 %v726, %v728
        %v730 = vadd.f32 %v726, %v729
        %vm731 = vweird.f32 %v542
        %vm732 = vweird.f32 %v726
        %vm733 = vmor %vm731, %vm732
        %v734 = vsel %vm733, %v726, %v730
        %v735 = vand.u32 2147483647, %v542
        %vm736 = vcmp.eq.f32.partialorder %v735, 8.507059e+37
        %v737 = vand.u32 %v542, 2147483648
        %v738 = vor.u32 1.1754944e-38, %v737
        %v739 = vsel %vm736, %v738, %v734
        %v740 = vmul.f32 1.0, %v739
        %v741 = vrcp.pop %v543
        %v742 = vmul.f32 %v543, %v741
        %v743 = vsub.f32 1.0, %v742
        %v744 = vmul.f32 %v741, %v743
        %v745 = vadd.f32 %v741, %v744
        %vm746 = vweird.f32 %v543
        %vm747 = vweird.f32 %v741
        %vm748 = vmor %vm746, %vm747
        %v749 = vsel %vm748, %v741, %v745
        %v750 = vand.u32 2147483647, %v543
        %vm751 = vcmp.eq.f32.partialorder %v750, 8.507059e+37
        %v752 = vand.u32 %v543, 2147483648
        %v753 = vor.u32 1.1754944e-38, %v752
        %v754 = vsel %vm751, %v753, %v749
        %v755 = vmul.f32 1.0, %v754
        %v756 = vrcp.pop %v544
        %v757 = vmul.f32 %v544, %v756
        %v758 = vsub.f32 1.0, %v757
        %v759 = vmul.f32 %v756, %v758
        %v760 = vadd.f32 %v756, %v759
        %vm761 = vweird.f32 %v544
        %vm762 = vweird.f32 %v756
        %vm763 = vmor %vm761, %vm762
        %v764 = vsel %vm763, %v756, %v760
        %v765 = vand.u32 2147483647, %v544
        %vm766 = vcmp.eq.f32.partialorder %v765, 8.507059e+37
        %v767 = vand.u32 %v544, 2147483648
        %v768 = vor.u32 1.1754944e-38, %v767
        %v769 = vsel %vm766, %v768, %v764
        %v770 = vmul.f32 1.0, %v769
        %v771 = vrcp.pop %v545
        %v772 = vmul.f32 %v545, %v771
        %v773 = vsub.f32 1.0, %v772
        %v774 = vmul.f32 %v771, %v773
        %v775 = vadd.f32 %v771, %v774
        %vm776 = vweird.f32 %v545
        %vm777 = vweird.f32 %v771
        %vm778 = vmor %vm776, %vm777
        %v779 = vsel %vm778, %v771, %v775
        %v780 = vand.u32 2147483647, %v545
        %vm781 = vcmp.eq.f32.partialorder %v780, 8.507059e+37
        %v782 = vand.u32 %v545, 2147483648
        %v783 = vor.u32 1.1754944e-38, %v782
        %v784 = vsel %vm781, %v783, %v779
        %v785 = vmul.f32 1.0, %v784
        %786 = vst [vmem:[%s277] sm:$0xff] %v560
        %787 = vst [vmem:[%s277 + $0x8] sm:$0xff] %v575
        %788 = vst [vmem:[%s277 + $0x10] sm:$0xff] %v590
        %789 = vst [vmem:[%s277 + $0x18] sm:$0xff] %v605
        %790 = vst [vmem:[%s277 + $0x20] sm:$0xff] %v620
        %791 = vst [vmem:[%s277 + $0x28] sm:$0xff] %v635
        %792 = vst [vmem:[%s277 + $0x30] sm:$0xff] %v650
        %793 = vst [vmem:[%s277 + $0x38] sm:$0xff] %v665
        %794 = vst [vmem:[%s277 + $0x40] sm:$0xff] %v680
        %795 = vst [vmem:[%s277 + $0x48] sm:$0xff] %v695
        %796 = vst [vmem:[%s277 + $0x50] sm:$0xff] %v710
        %797 = vst [vmem:[%s277 + $0x58] sm:$0xff] %v725
        %798 = vst [vmem:[%s277 + $0x60] sm:$0xff] %v740
        %799 = vst [vmem:[%s277 + $0x68] sm:$0xff] %v755
        %800 = vst [vmem:[%s277 + $0x70] sm:$0xff] %v770
        %801 = vst [vmem:[%s277 + $0x78] sm:$0xff] %v785
        %s802 = sand.u32 %s141, 1
        %s803 = scalar_lea.sflag [#allocation4], %s802
        %s804 = sand.u32 %s141, 1
        %s805 = smul.addr %s804, 128
        %s806 = scalar_lea.vmem [#allocation8], %s805
        // Predicated region
        $region53: #{tpu_custom_call.1} parent=39 // pred_check
          %p807 = pneg %p151
        $region54: #{tpu_custom_call.1} parent=39 // pred_check_branch
          %809 = sbr.rel (%p807) target = $region56
        $region55: #{tpu_custom_call.1} parent=39 // pred_region
          %s810 = smul.u32 16, %s23
          %812 = vsyncadd %s803, 0
          %s813 = smul.addr %s810, 8
          %s814 = scalar_lea.hbm %s5, %s813
          %s815 = sshll.u32 %s806, 4
          %s816 = int_to_ptr.vmem [resolvable:$true] %s815
          %s817 = sshll.u32 %s814, 4
          %s818 = int_to_ptr.hbm [resolvable:$true] %s817
          %823 = dma.vmem_to_hbm [thread:$0]  %s816, 2048, %s818, %s803, 128, 128, 8
        $region56: #{tpu_custom_call.1} parent=39 // pred_fallthru
          _
      $region40: #{tpu_custom_call.1} parent=5 // pred_fallthru
        _
      %p824 = scmp.le.s32.totalorder 2, %s18
      // Predicated region
      $region57: #{tpu_custom_call.1} parent=5 // pred_check
        %p825 = pneg %p824
      $region58: #{tpu_custom_call.1} parent=5 // pred_check_branch
        %827 = sbr.rel (%p825) target = $region60
      $region59: #{tpu_custom_call.1} parent=5 // pred_region
        %s828 = ssub.s32 %s18, 2
        // Predicated region
        $region61: #{tpu_custom_call.1} parent=59 // pred_check
          %p829 = pneg %p157
        $region62: #{tpu_custom_call.1} parent=59 // pred_check_branch
          %831 = sbr.rel (%p829) target = $region64
        $region63: #{tpu_custom_call.1} parent=59 // pred_region
          %s832 = sand.u32 %s142, 1
          %s833 = scalar_lea.sflag [#allocation4], %s832
          %s834 = sand.u32 %s142, 1
          %s835 = smul.addr %s834, 128
          %s836 = scalar_lea.vmem [#allocation8], %s835
          %838 = dma.done %s833, 2048
        $region64: #{tpu_custom_call.1} parent=59 // pred_fallthru
          _
      $region60: #{tpu_custom_call.1} parent=5 // pred_fallthru
        _
    $region6: #{tpu_custom_call.1} parent=1 // loop_footer
      %s22 = sadd.s32 1, %s18
    $region7: #{tpu_custom_call.1} parent=1 // loop_footer_branch
      %17 = sbr.rel target = $region3
    $region8: #{tpu_custom_call.1} parent=1 // loop_exit
      _
    %839 = vsyncpa [#allocation3], 1
    %s840 = scalar_lea.sflag [#allocation3], 1
    %841 = vsyncpa %s840, 1
    %842 = vsyncpa [#allocation6], 1
    %843 = vsyncpa [#allocation4], 1
    %s844 = scalar_lea.sflag [#allocation4], 1
    %845 = vsyncpa %s844, 1

</llo_original>
